<compile_context>
chip_gen: v7x
topology: tpu7x:2x2x1
jax: 0.10.0
libtpu: 0.0.40
codegen_flags: <defaults>
</compile_context>

<pallas_src>
from functools import partial

import jax
import jax.numpy as jnp
from jax import lax
from jax.experimental import pallas as pl
from jax.experimental.pallas import tpu as pltpu

# ----------------------------- config (small) -----------------------------
GPT_CONFIG_SMALL = dict(
    vocab_size=256,       # V (multiple of 128 -> lane-dense logits)
    context_length=16,    # max positions
    emb_dim=32,           # E
    n_heads=2,
    n_layers=2,           # DummyTransformerBlock == identity, so unused in math
    drop_rate=0.1,        # dropout treated as identity (eval semantics)
    qkv_bias=False,
)


# ----------------------------- Pallas kernel ------------------------------
def _dummy_gpt_kernel(idx_ref, emb_ref, w_ref, out_ref, *, vocab_size, seq_len):
    # idx_ref: (tm, 1)   int32  flattened token ids for this M-tile
    # emb_ref: (V+T, E)  stacked [tok_table; pos_table[:T]]  (VMEM-resident across steps)
    # w_ref:   (V, E)    nn.Linear(E, V, bias=False) weight in native PyTorch layout
    # out_ref: (tm, V)   logits tile (lane-dense: V is a multiple of 128)
    tm = idx_ref.shape[0]
    VT, E = emb_ref.shape
    V = vocab_size
    T = seq_len

    # Clamp untrusted ids so OOB ids act like a clamped gather (not a silent zero row).
    ids = jnp.clip(idx_ref[...], 0, V - 1)                                # (tm, 1)

    # Fused tok+pos gather as ONE multi-hot @ [tok;pos] MXU matmul:
    #   row m selects column ids[m] (token row) and column V + (global_m % T) (position row).
    col = lax.broadcasted_iota(jnp.int32, (tm, VT), 1)
    row = lax.broadcasted_iota(jnp.int32, (tm, VT), 0) + pl.program_id(0) * tm
    hit = (col == ids) | (col == V + (row % T))                           # two 1s per row
    mask = hit.astype(emb_ref.dtype)                                      # exact 0/1 (bf16 or f32)

    x = jnp.dot(mask, emb_ref[...], preferred_element_type=jnp.float32)   # (tm, E) = tok + pos

    # TODO(synk): nn.Dropout in train mode is stochastic; implemented as identity
    # (eval semantics). DummyTransformerBlock / DummyLayerNorm are identity by spec.

    # logits = x @ W.T  (contract on E, weight kept in its native (V, E) layout)
    out_ref[...] = lax.dot_general(
        x.astype(w_ref.dtype), w_ref[...],
        dimension_numbers=(((1,), (1,)), ((), ())),
        preferred_element_type=jnp.float32,
    ).astype(out_ref.dtype)


# ----------------------------- wrapper -------------------------------------
def dummy_gpt_forward(in_idx, tok_emb_table, pos_emb_table, out_head_w,
                      *, param_dtype=jnp.float32, block_m=256):
    """Forward pass of DummyGPTModel.

    in_idx:         (B, T) int32 token ids
    tok_emb_table:  (V, E) float32
    pos_emb_table:  (Ctx, E) float32
    out_head_w:     (V, E) float32   (PyTorch nn.Linear weight layout)
    param_dtype:    MXU operand dtype (f32 = exact PyTorch semantics; bf16 = MXU-native)
    returns logits: (B, T, V) float32
    """
    B, T = in_idx.shape
    V, E = tok_emb_table.shape
    ctx = pos_emb_table.shape[0]
    if T > ctx:
        raise ValueError(f"seq_len {T} exceeds context_length {ctx}")

    M = B * T
    tm = min(M, block_m)          # one M-tile per grid step; grid=(1,) at toy sizes
    grid_m = pl.cdiv(M, tm)

    # One-time (cached under jit) stack: [tok_table; pos_table[:T]] -> (V+T, E).
    emb_stack = jnp.concatenate([tok_emb_table, pos_emb_table[:T]], axis=0).astype(param_dtype)
    w = out_head_w.astype(param_dtype)

    # Flatten ids to (M, 1); under jit this is a fused metadata-only op (reviewed as noise).
    idx_flat = in_idx.reshape(M, 1).astype(jnp.int32)

    kernel = partial(_dummy_gpt_kernel, vocab_size=V, seq_len=T)

    itemsize = jnp.dtype(param_dtype).itemsize
    cost = pl.CostEstimate(
        flops=2 * M * (V + T) * E + 2 * M * E * V,   # fused gather matmul + out head
        transcendentals=0,
        bytes_accessed=M * 4 + (V + T) * E * itemsize + V * E * itemsize + M * V * 4,
    )

    logits_flat = pl.pallas_call(
        kernel,
        out_shape=jax.ShapeDtypeStruct((M, V), jnp.float32),
        grid=(grid_m,),
        in_specs=[
            pl.BlockSpec((tm, 1), lambda i: (i, 0)),        # token-id tile
            pl.BlockSpec((V + T, E), lambda i: (0, 0)),     # stacked emb table, VMEM-resident
            pl.BlockSpec((V, E), lambda i: (0, 0)),         # out-head weight, VMEM-resident
        ],
        out_specs=pl.BlockSpec((tm, V), lambda i: (i, 0)),  # lane-dense logits tile
        compiler_params=pltpu.CompilerParams(
            # Independent M-tiles: shards across v7x's 2 TensorCores; no-op on v5e/v6e.
            dimension_semantics=("parallel",),
            # Explicit budget (well under v7x's 64 MiB physical VMEM).
            vmem_limit_bytes=32 << 20,
        ),
        cost_estimate=cost,
    )(idx_flat, emb_stack, w)

    # Row-major (M, V) -> (B, T, V) is a metadata-only reshape.
    return logits_flat.reshape(B, T, V)


# ----------------------------- reference (plain JAX) -----------------------
def dummy_gpt_forward_ref(in_idx, tok_emb_table, pos_emb_table, out_head_w):
    B, T = in_idx.shape
    x = tok_emb_table[in_idx] + pos_emb_table[:T][None, :, :]
    return jnp.einsum("bte,ve->btv", x, out_head_w)


# ----------------------------- main ----------------------------------------
if __name__ == "__main__":
    cfg = GPT_CONFIG_SMALL
    V, E, CTX = cfg["vocab_size"], cfg["emb_dim"], cfg["context_length"]

    key = jax.random.PRNGKey(0)
    k_tok, k_pos, k_w, k_idx = jax.random.split(key, 4)

    # Deterministic parameter init (nn.Embedding default ~ N(0,1); Linear weight scaled normal)
    tok_emb_table = jax.random.normal(k_tok, (V, E), dtype=jnp.float32)
    pos_emb_table = jax.random.normal(k_pos, (CTX, E), dtype=jnp.float32)
    out_head_w = jax.random.normal(k_w, (V, E), dtype=jnp.float32) * (1.0 / jnp.sqrt(E))

    # Example input batch: batch=2, seq_len=8 token ids
    B, T = 2, 8
    in_idx = jax.random.randint(k_idx, (B, T), 0, V, dtype=jnp.int32)

    ref = dummy_gpt_forward_ref(in_idx, tok_emb_table, pos_emb_table, out_head_w)

    # f32 path: exact PyTorch semantics, tight tolerance.
    fwd_f32 = jax.jit(dummy_gpt_forward)
    logits = jax.block_until_ready(fwd_f32(in_idx, tok_emb_table, pos_emb_table, out_head_w))
    assert logits.shape == (B, T, V), logits.shape
    assert jnp.allclose(logits, ref, atol=5e-4, rtol=5e-4), "f32 path mismatch vs reference"

    # bf16-MXU path (review item: bf16-native MXUs); accumulation in f32, looser tolerance.
    fwd_bf16 = jax.jit(partial(dummy_gpt_forward, param_dtype=jnp.bfloat16))
    logits_bf16 = jax.block_until_ready(
        fwd_bf16(in_idx, tok_emb_table, pos_emb_table, out_head_w))
    assert logits_bf16.shape == (B, T, V), logits_bf16.shape
    assert jnp.allclose(logits_bf16, ref, atol=2e-1, rtol=5e-2), "bf16 path mismatch vs reference"

    print("KERNEL_OK")
</pallas_src>

<mosaic_0001>
module attributes {stable_mosaic.version = 11 : i64} {
  func.func @_dummy_gpt_kernel(%arg0: i32, %arg1: memref<16x1xi32, #tpu.memory_space<vmem>>, %arg2: memref<264x32xf32, #tpu.memory_space<vmem>>, %arg3: memref<256x32xf32, #tpu.memory_space<vmem>>, %arg4: memref<16x256xf32, #tpu.memory_space<vmem>>) attributes {dimension_semantics = [#tpu.dimension_semantics<parallel>], iteration_bounds = array<i64: 1>, scalar_prefetch = 0 : i64, scratch_operands = 0 : i64, tpu.core_type = #tpu.core_type<tc>, window_params = [{transform_indices = @transform_0, window_bounds = array<i64: 16, 1>}, {pipeline_mode = #tpu.pipeline_mode<synchronous>, transform_indices = @transform_1, window_bounds = array<i64: 264, 32>}, {pipeline_mode = #tpu.pipeline_mode<synchronous>, transform_indices = @transform_2, window_bounds = array<i64: 256, 32>}, {transform_indices = @transform_3, window_bounds = array<i64: 16, 256>}]} {
    %c0 = arith.constant 0 : index
    %c0_0 = arith.constant 0 : index
    %0 = vector.load %arg1[%c0, %c0_0] : memref<16x1xi32, #tpu.memory_space<vmem>>, vector<16x1xi32>
    %c0_i32 = arith.constant 0 : i32
    %c255_i32 = arith.constant 255 : i32
    %1 = vector.broadcast %c0_i32 : i32 to vector<16x1xi32>
    %2 = arith.maxsi %1, %0 : vector<16x1xi32>
    %3 = vector.broadcast %c255_i32 : i32 to vector<16x1xi32>
    %4 = arith.minsi %3, %2 : vector<16x1xi32>
    %5 = tpu.iota {dimensions = array<i32: 1>} : vector<16x264xi32>
    %6 = tpu.iota {dimensions = array<i32: 0>} : vector<16x264xi32>
    %c16_i32 = arith.constant 16 : i32
    %7 = arith.muli %arg0, %c16_i32 : i32
    %8 = vector.broadcast %7 : i32 to vector<16x264xi32>
    %9 = arith.addi %6, %8 : vector<16x264xi32>
    %10 = vector.broadcast %4 : vector<16x1xi32> to vector<16x264xi32>
    %11 = arith.cmpi eq, %5, %10 : vector<16x264xi32>
    %c8_i32 = arith.constant 8 : i32
    %c0_i32_1 = arith.constant 0 : i32
    %12 = arith.cmpi eq, %c8_i32, %c0_i32_1 : i32
    %c1_i32 = arith.constant 1 : i32
    %13 = arith.select %12, %c1_i32, %c8_i32 : i32
    %14 = vector.broadcast %13 : i32 to vector<16x264xi32>
    %15 = arith.remsi %9, %14 : vector<16x264xi32>
    %c0_i32_2 = arith.constant 0 : i32
    %16 = vector.broadcast %c0_i32_2 : i32 to vector<16x264xi32>
    %17 = arith.cmpi ne, %15, %16 : vector<16x264xi32>
    %c0_i32_3 = arith.constant 0 : i32
    %18 = vector.broadcast %c0_i32_3 : i32 to vector<16x264xi32>
    %19 = arith.cmpi slt, %15, %18 : vector<16x264xi32>
    %c0_i32_4 = arith.constant 0 : i32
    %20 = arith.cmpi slt, %13, %c0_i32_4 : i32
    %21 = vector.broadcast %20 : i1 to vector<16x264xi1>
    %22 = vector.broadcast %21 : vector<16x264xi1> to vector<16x264xi1>
    %23 = arith.xori %19, %22 : vector<16x264xi1>
    %24 = arith.andi %23, %17 : vector<16x264xi1>
    %25 = vector.broadcast %13 : i32 to vector<16x264xi32>
    %26 = arith.addi %15, %25 : vector<16x264xi32>
    %27 = arith.select %24, %26, %15 : vector<16x264xi1>, vector<16x264xi32>
    %c256_i32 = arith.constant 256 : i32
    %28 = vector.broadcast %c256_i32 : i32 to vector<16x264xi32>
    %29 = arith.addi %28, %27 : vector<16x264xi32>
    %30 = arith.cmpi eq, %5, %29 : vector<16x264xi32>
    %31 = arith.ori %11, %30 : vector<16x264xi1>
    %32 = arith.extui %31 : vector<16x264xi1> to vector<16x264xi32>
    %33 = arith.sitofp %32 : vector<16x264xi32> to vector<16x264xf32>
    %c0_5 = arith.constant 0 : index
    %c0_6 = arith.constant 0 : index
    %34 = vector.load %arg2[%c0_5, %c0_6] : memref<264x32xf32, #tpu.memory_space<vmem>>, vector<264x32xf32>
    %cst = arith.constant dense<0.000000e+00> : vector<16x32xf32>
    %35 = tpu.matmul %33, %34, %cst {dimension_numbers = #tpu.dot_dimension_numbers<[1], [0], [0], [1], [0, 0, 1, 1], [], []>} : vector<16x264xf32>, vector<264x32xf32>, vector<16x32xf32> -> vector<16x32xf32>
    %c0_7 = arith.constant 0 : index
    %c0_8 = arith.constant 0 : index
    %36 = vector.load %arg3[%c0_7, %c0_8] : memref<256x32xf32, #tpu.memory_space<vmem>>, vector<256x32xf32>
    %cst_9 = arith.constant dense<0.000000e+00> : vector<16x256xf32>
    %37 = tpu.matmul %35, %36, %cst_9 {dimension_numbers = #tpu.dot_dimension_numbers<[1], [1], [0], [0], [0, 0, 1, 0], [], []>} : vector<16x32xf32>, vector<256x32xf32>, vector<16x256xf32> -> vector<16x256xf32>
    %c0_10 = arith.constant 0 : index
    %c0_11 = arith.constant 0 : index
    %38 = vector.load %arg4[%c0_10, %c0_11] : memref<16x256xf32, #tpu.memory_space<vmem>>, vector<16x256xf32>
    tpu.vector_store %arg4[%c0_10, %c0_11], %37 {strides = array<i32>} : memref<16x256xf32, #tpu.memory_space<vmem>>, vector<16x256xf32>,
    return
  }
  func.func @transform_0(%arg0: i32) -> (i32, i32) {
    %c0_i32 = arith.constant 0 : i32
    %c0_i32_0 = arith.constant 0 : i32
    return %arg0, %c0_i32 : i32, i32
  }
  func.func @transform_1(%arg0: i32) -> (i32, i32) {
    %c0_i32 = arith.constant 0 : i32
    %c0_i32_0 = arith.constant 0 : i32
    %c0_i32_1 = arith.constant 0 : i32
    return %c0_i32, %c0_i32_0 : i32, i32
  }
  func.func @transform_2(%arg0: i32) -> (i32, i32) {
    %c0_i32 = arith.constant 0 : i32
    %c0_i32_0 = arith.constant 0 : i32
    %c0_i32_1 = arith.constant 0 : i32
    return %c0_i32, %c0_i32_0 : i32, i32
  }
  func.func @transform_3(%arg0: i32) -> (i32, i32) {
    %c0_i32 = arith.constant 0 : i32
    %c0_i32_0 = arith.constant 0 : i32
    return %arg0, %c0_i32 : i32, i32
  }
}

</mosaic_0001>

<llo_original>
// kernel: dummy_gpt_forward.1
$region0: #{dummy_gpt_forward.1}
  #allocation0 [shape = 'u32[]', space=smem, size = 0x4, offset = 0x4, fixed_abs, tag = 'smem constant byte address 0x4 - core index']
  #allocation1 [shape = 'u32[144,128]{1,0:T(1,128)}', space=vmem, size = 0x12000, scoped, tag = 'internal scratch']
  %s0 = inlined_call_operand.vmem [shape: s32[16,1], index: 0, kind: input, shape index: {}]
  %s1 = inlined_call_operand.vmem [shape: f32[264,32], index: 1, kind: input, shape index: {}]
  %s2 = inlined_call_operand.vmem [shape: f32[256,32], index: 2, kind: input, shape index: {}]
  %s3 = inlined_call_operand.hbm [shape: f32[16,256], index: 3, kind: output, shape index: {}]
  %s4 = sld [smem:[#allocation0]]
  $region22: #{dummy_gpt_forward.1} parent=0
    _
  %s6 = ssub.s32 1, %s4
  %s7 = scalar_select 0, %s6, %s4
  $region1: #{dummy_gpt_forward.1} parent=0
    #allocation2 [shape = 'u8[16384]{0}', space=vmem, size = 0x4000, scoped, tag = 'output window, operand 0, single buffered']
    #allocation3 [shape = 's32[1]{0}', space=sflag, size = 0x4, scoped, tag = 'scoped memory for dummy_gpt_forward.1']
    %8 = vsyncpa [#allocation3], 0
    // Predicated region
    $region2: #{dummy_gpt_forward.1} parent=1 // pred_check
      _
    $region3: #{dummy_gpt_forward.1} parent=1 // pred_check_branch
      %10 = sbr.rel (0) target = $region5
    $region4: #{dummy_gpt_forward.1} parent=1 // pred_region
      _
    $region5: #{dummy_gpt_forward.1} parent=1 // pred_fallthru
      _
    // Predicated region
    $region6: #{dummy_gpt_forward.1} parent=1 // pred_check
      _
    $region7: #{dummy_gpt_forward.1} parent=1 // pred_check_branch
      %12 = sbr.rel (0) target = $region9
    $region8: #{dummy_gpt_forward.1} parent=1 // pred_region
      _
    $region9: #{dummy_gpt_forward.1} parent=1 // pred_fallthru
      _
    // Predicated region
    $region10: #{dummy_gpt_forward.1} parent=1 // pred_check
      _
    $region11: #{dummy_gpt_forward.1} parent=1 // pred_check_branch
      %14 = sbr.rel (0) target = $region13
    $region12: #{dummy_gpt_forward.1} parent=1 // pred_region
      _
    $region13: #{dummy_gpt_forward.1} parent=1 // pred_fallthru
      _
    %v15 = vld [vmem:[%s0] sm:$0xff]
    %v16 = vld [vmem:[%s0 + $0x8] sm:$0xff]
    %vm17 = vcmp.gt.s32.totalorder %v15, 0
    %v18 = vsel %vm17, %v15, 0
    %vm19 = vcmp.gt.s32.totalorder %v16, 0
    %v20 = vsel %vm19, %v16, 0
    %vm21 = vcmp.lt.s32.totalorder %v18, 255
    %v22 = vsel %vm21, %v18, 255
    %vm23 = vcmp.lt.s32.totalorder %v20, 255
    %v24 = vsel %vm23, %v20, 255
    %v25 = vlaneseq
    %v26 = vand.u32 %v25, 127
    %v27 = vadd.s32 %v26, 128
    %v28 = vadd.s32 %v26, 256
    %v29 = vlaneseq
    %v30 = vshrl.u32 %v29, 7
    %v31 = vadd.s32 %v30, 8
    %s32 = smul.u32 0, 16
    %v33 = vstv %s32
    %v34 = vadd.s32 %v30, %v33
    %v35 = vadd.s32 %v31, %v33
    %36 = vset.pattern.permute.xlu0 0
    %37 = vperm.xlu0 %36, %v22
    %v38 = vpop.permute.xlu0 %37
    %39 = vset.pattern.permute.xlu0 0
    %40 = vperm.xlu0 %39, %v24
    %v41 = vpop.permute.xlu0 %40
    %vm42 = vcmp.eq.s32.totalorder %v26, %v38
    %vm43 = vcmp.eq.s32.totalorder %v27, %v38
    %vm44 = vcmp.eq.s32.totalorder %v28, %v38
    %vm45 = vcmp.eq.s32.totalorder %v26, %v41
    %vm46 = vcmp.eq.s32.totalorder %v27, %v41
    %vm47 = vcmp.eq.s32.totalorder %v28, %v41
    %vm48 = vcmp.lt.s32.totalorder %v34, 0
    %v49 = vsub.s32 0, %v34
    %v50 = vsel %vm48, %v49, %v34
    %v51 = vshrl.u32 %v50, 3
    %v52 = vand.u32 %v50, 7
    %v53 = vsub.s32 0, %v52
    %v54 = vsel %vm48, %v53, %v52
    %vm55 = vcmp.lt.s32.totalorder %v35, 0
    %v56 = vsub.s32 0, %v35
    %v57 = vsel %vm55, %v56, %v35
    %v58 = vshrl.u32 %v57, 3
    %v59 = vand.u32 %v57, 7
    %v60 = vsub.s32 0, %v59
    %v61 = vsel %vm55, %v60, %v59
    %vm62 = vcmp.ne.s32.totalorder %v54, 0
    %vm63 = vcmp.ne.s32.totalorder %v61, 0
    %vm64 = vcmp.lt.s32.totalorder %v54, 0
    %vm65 = vcmp.lt.s32.totalorder %v61, 0
    %vm66 = vmand %vm64, %vm62
    %vm67 = vmand %vm65, %vm63
    %v68 = vadd.s32 %v54, 8
    %v69 = vadd.s32 %v61, 8
    %v70 = vsel %vm66, %v68, %v54
    %v71 = vsel %vm67, %v69, %v61
    %v72 = vadd.s32 %v70, 256
    %v73 = vadd.s32 %v71, 256
    %vm74 = vcmp.eq.s32.totalorder %v26, %v72
    %vm75 = vcmp.eq.s32.totalorder %v27, %v72
    %vm76 = vcmp.eq.s32.totalorder %v28, %v72
    %vm77 = vcmp.eq.s32.totalorder %v26, %v73
    %vm78 = vcmp.eq.s32.totalorder %v27, %v73
    %vm79 = vcmp.eq.s32.totalorder %v28, %v73
    %vm80 = vmor %vm42, %vm74
    %vm81 = vmor %vm43, %vm75
    %vm82 = vmor %vm44, %vm76
    %vm83 = vmor %vm45, %vm77
    %vm84 = vmor %vm46, %vm78
    %vm85 = vmor %vm47, %vm79
    %v86 = vsel %vm80, 1, 0
    %v87 = vsel %vm81, 1, 0
    %v88 = vsel %vm82, 1, 0
    %v89 = vsel %vm83, 1, 0
    %v90 = vsel %vm84, 1, 0
    %v91 = vsel %vm85, 1, 0
    %v92 = vcvt.s32.f32 %v86
    %v93 = vcvt.s32.f32 %v87
    %v94 = vcvt.s32.f32 %v88
    %v95 = vcvt.s32.f32 %v89
    %v96 = vcvt.s32.f32 %v90
    %v97 = vcvt.s32.f32 %v91
    %v98 = vld [vmem:[%s1] sm:$0xff]
    %v99 = vld [vmem:[%s1 + $0x8] sm:$0xff]
    %v100 = vld [vmem:[%s1 + $0x10] sm:$0xff]
    %v101 = vld [vmem:[%s1 + $0x18] sm:$0xff]
    %v102 = vld [vmem:[%s1 + $0x20] sm:$0xff]
    %v103 = vld [vmem:[%s1 + $0x28] sm:$0xff]
    %v104 = vld [vmem:[%s1 + $0x30] sm:$0xff]
    %v105 = vld [vmem:[%s1 + $0x38] sm:$0xff]
    %v106 = vld [vmem:[%s1 + $0x40] sm:$0xff]
    %v107 = vld [vmem:[%s1 + $0x48] sm:$0xff]
    %v108 = vld [vmem:[%s1 + $0x50] sm:$0xff]
    %v109 = vld [vmem:[%s1 + $0x58] sm:$0xff]
    %v110 = vld [vmem:[%s1 + $0x60] sm:$0xff]
    %v111 = vld [vmem:[%s1 + $0x68] sm:$0xff]
    %v112 = vld [vmem:[%s1 + $0x70] sm:$0xff]
    %v113 = vld [vmem:[%s1 + $0x78] sm:$0xff]
    %v114 = vld [vmem:[%s1 + $0x80] sm:$0xff]
    %v115 = vld [vmem:[%s1 + $0x88] sm:$0xff]
    %v116 = vld [vmem:[%s1 + $0x90] sm:$0xff]
    %v117 = vld [vmem:[%s1 + $0x98] sm:$0xff]
    %v118 = vld [vmem:[%s1 + $0xa0] sm:$0xff]
    %v119 = vld [vmem:[%s1 + $0xa8] sm:$0xff]
    %v120 = vld [vmem:[%s1 + $0xb0] sm:$0xff]
    %v121 = vld [vmem:[%s1 + $0xb8] sm:$0xff]
    %v122 = vld [vmem:[%s1 + $0xc0] sm:$0xff]
    %v123 = vld [vmem:[%s1 + $0xc8] sm:$0xff]
    %v124 = vld [vmem:[%s1 + $0xd0] sm:$0xff]
    %v125 = vld [vmem:[%s1 + $0xd8] sm:$0xff]
    %v126 = vld [vmem:[%s1 + $0xe0] sm:$0xff]
    %v127 = vld [vmem:[%s1 + $0xe8] sm:$0xff]
    %v128 = vld [vmem:[%s1 + $0xf0] sm:$0xff]
    %v129 = vld [vmem:[%s1 + $0xf8] sm:$0xff]
    %v130 = vld [vmem:[%s1 + $0x100] sm:$0xff]
    %vm131 = vcmask 64512
    %v133 = vsel %vm131, %v94, 0
    %v136 = vsel %vm131, %v97, 0
    %138 = vmatprep.subr.mxu0 0.0
    %139 = vmatpush1.msra.mxu0 %v98
    %140 = vmatprep.subr.mxu0 0.0
    %141 = vmatpush1.msra.mxu0 %v99
    %142 = vmatprep.subr.mxu0 0.0
    %143 = vmatpush1.msra.mxu0 %v100
    %144 = vmatprep.subr.mxu0 0.0
    %145 = vmatpush1.msra.mxu0 %v101
    %146 = vmatprep.subr.mxu0 0.0
    %147 = vmatpush1.msra.mxu0 %v102
    %148 = vmatprep.subr.mxu0 0.0
    %149 = vmatpush1.msra.mxu0 %v103
    %150 = vmatprep.subr.mxu0 0.0
    %151 = vmatpush1.msra.mxu0 %v104
    %152 = vmatprep.subr.mxu0 0.0
    %153 = vmatpush1.msra.mxu0 %v105
    %154 = vmatprep.subr.mxu0 0.0
    %155 = vmatpush1.msra.mxu0 %v106
    %156 = vmatprep.subr.mxu0 0.0
    %157 = vmatpush1.msra.mxu0 %v107
    %158 = vmatprep.subr.mxu0 0.0
    %159 = vmatpush1.msra.mxu0 %v108
    %160 = vmatprep.subr.mxu0 0.0
    %161 = vmatpush1.msra.mxu0 %v109
    %162 = vmatprep.subr.mxu0 0.0
    %163 = vmatpush1.msra.mxu0 %v110
    %164 = vmatprep.subr.mxu0 0.0
    %165 = vmatpush1.msra.mxu0 %v111
    %166 = vmatprep.subr.mxu0 0.0
    %167 = vmatpush1.msra.mxu0 %v112
    %168 = vmatprep.subr.mxu0 0.0
    %169 = vmatpush1.msra.mxu0 %v113
    %170 = vmatprep.subr.mxu0 0.0
    %171 = vmatpush1.msra.mxu0 %v114
    %172 = vmatprep.subr.mxu0 0.0
    %173 = vmatpush1.msra.mxu0 %v115
    %174 = vmatprep.subr.mxu0 0.0
    %175 = vmatpush1.msra.mxu0 %v116
    %176 = vmatprep.subr.mxu0 0.0
    %177 = vmatpush1.msra.mxu0 %v117
    %178 = vmatprep.subr.mxu0 0.0
    %179 = vmatpush1.msra.mxu0 %v118
    %180 = vmatprep.subr.mxu0 0.0
    %181 = vmatpush1.msra.mxu0 %v119
    %182 = vmatprep.subr.mxu0 0.0
    %183 = vmatpush1.msra.mxu0 %v120
    %184 = vmatprep.subr.mxu0 0.0
    %185 = vmatpush1.msra.mxu0 %v121
    %186 = vmatprep.subr.mxu0 0.0
    %187 = vmatpush1.msra.mxu0 %v122
    %188 = vmatprep.subr.mxu0 0.0
    %189 = vmatpush1.msra.mxu0 %v123
    %190 = vmatprep.subr.mxu0 0.0
    %191 = vmatpush1.msra.mxu0 %v124
    %192 = vmatprep.subr.mxu0 0.0
    %193 = vmatpush1.msra.mxu0 %v125
    %194 = vmatprep.subr.mxu0 0.0
    %195 = vmatpush1.msra.mxu0 %v126
    %196 = vmatprep.subr.mxu0 0.0
    %197 = vmatpush1.msra.mxu0 %v127
    %198 = vmatprep.subr.mxu0 0.0
    %199 = vmatpush1.msra.mxu0 %v128
    %200 = vmatprep.subr.mxu0 0.0
    %201 = vmatpush1.msra.mxu0 %v129
    %202 = vmatprep.mubr.f32.mxu0 %v93
    %203 = vmatmul.mubr.f32.gmra.mrb[0].mxu0 %v92
    %v204 = vpop.f32.mrb[0].mxu0
    %v205 = vadd.f32 0.0, %v204
    %v206 = vpop.f32.mrb[0].mxu0
    %207 = vmatprep.mubr.f32.mxu0 %v96
    %208 = vmatmul.mubr.f32.gmra.mrb[0].mxu0 %v95
    %v209 = vpop.f32.mrb[0].mxu0
    %v210 = vadd.f32 0.0, %v209
    %v211 = vpop.f32.mrb[0].mxu0
    %212 = vdwg.mxu0
    %213 = vmatprep.subr.mxu0 0.0
    %214 = vmatpush1.msra.mxu0 %v130
    %215 = vmatprep.subr.mxu0 0.0
    %216 = vmatpush1.msra.mxu0 0.0
    %217 = vmatprep.subr.mxu0 0.0
    %218 = vmatpush1.msra.mxu0 0.0
    %219 = vmatprep.subr.mxu0 0.0
    %220 = vmatpush1.msra.mxu0 0.0
    %221 = vmatprep.subr.mxu0 0.0
    %222 = vmatpush1.msra.mxu0 0.0
    %223 = vmatprep.subr.mxu0 0.0
    %224 = vmatpush1.msra.mxu0 0.0
    %225 = vmatprep.subr.mxu0 0.0
    %226 = vmatpush1.msra.mxu0 0.0
    %227 = vmatprep.subr.mxu0 0.0
    %228 = vmatpush1.msra.mxu0 0.0
    %229 = vmatprep.subr.mxu0 0.0
    %230 = vmatpush1.msra.mxu0 0.0
    %231 = vmatprep.subr.mxu0 0.0
    %232 = vmatpush1.msra.mxu0 0.0
    %233 = vmatprep.subr.mxu0 0.0
    %234 = vmatpush1.msra.mxu0 0.0
    %235 = vmatprep.subr.mxu0 0.0
    %236 = vmatpush1.msra.mxu0 0.0
    %237 = vmatprep.subr.mxu0 0.0
    %238 = vmatpush1.msra.mxu0 0.0
    %239 = vmatprep.subr.mxu0 0.0
    %240 = vmatpush1.msra.mxu0 0.0
    %241 = vmatprep.subr.mxu0 0.0
    %242 = vmatpush1.msra.mxu0 0.0
    %243 = vmatprep.subr.mxu0 0.0
    %244 = vmatpush1.msra.mxu0 0.0
    %245 = vmatprep.subr.mxu0 0.0
    %246 = vmatpush1.msra.mxu0 0.0
    %247 = vmatprep.subr.mxu0 0.0
    %248 = vmatpush1.msra.mxu0 0.0
    %249 = vmatprep.subr.mxu0 0.0
    %250 = vmatpush1.msra.mxu0 0.0
    %251 = vmatprep.subr.mxu0 0.0
    %252 = vmatpush1.msra.mxu0 0.0
    %253 = vmatprep.subr.mxu0 0.0
    %254 = vmatpush1.msra.mxu0 0.0
    %255 = vmatprep.subr.mxu0 0.0
    %256 = vmatpush1.msra.mxu0 0.0
    %257 = vmatprep.subr.mxu0 0.0
    %258 = vmatpush1.msra.mxu0 0.0
    %259 = vmatprep.subr.mxu0 0.0
    %260 = vmatpush1.msra.mxu0 0.0
    %261 = vmatprep.subr.mxu0 0.0
    %262 = vmatpush1.msra.mxu0 0.0
    %263 = vmatprep.subr.mxu0 0.0
    %264 = vmatpush1.msra.mxu0 0.0
    %265 = vmatprep.subr.mxu0 0.0
    %266 = vmatpush1.msra.mxu0 0.0
    %267 = vmatprep.subr.mxu0 0.0
    %268 = vmatpush1.msra.mxu0 0.0
    %269 = vmatprep.subr.mxu0 0.0
    %270 = vmatpush1.msra.mxu0 0.0
    %271 = vmatprep.subr.mxu0 0.0
    %272 = vmatpush1.msra.mxu0 0.0
    %273 = vmatprep.subr.mxu0 0.0
    %274 = vmatpush1.msra.mxu0 0.0
    %275 = vmatprep.subr.mxu0 0.0
    %276 = vmatpush1.msra.mxu0 0.0
    %277 = vmatprep.mubr.f32.mxu0 0.0
    %278 = vmatmul.mubr.f32.gmra.mrb[0].mxu0 %v133
    %v279 = vpop.f32.mrb[0].mxu0
    %v280 = vadd.f32 %v205, %v279
    %v281 = vpop.f32.mrb[0].mxu0
    %282 = vmatprep.mubr.f32.mxu0 0.0
    %283 = vmatmul.mubr.f32.gmra.mrb[0].mxu0 %v136
    %v284 = vpop.f32.mrb[0].mxu0
    %v285 = vadd.f32 %v210, %v284
    %v286 = vpop.f32.mrb[0].mxu0
    %287 = vdwg.mxu0
    %v288 = vld [vmem:[%s2] sm:$0xff]
    %v289 = vld [vmem:[%s2 + $0x8] sm:$0xff]
    %v290 = vld [vmem:[%s2 + $0x10] sm:$0xff]
    %v291 = vld [vmem:[%s2 + $0x18] sm:$0xff]
    %v292 = vld [vmem:[%s2 + $0x20] sm:$0xff]
    %v293 = vld [vmem:[%s2 + $0x28] sm:$0xff]
    %v294 = vld [vmem:[%s2 + $0x30] sm:$0xff]
    %v295 = vld [vmem:[%s2 + $0x38] sm:$0xff]
    %v296 = vld [vmem:[%s2 + $0x40] sm:$0xff]
    %v297 = vld [vmem:[%s2 + $0x48] sm:$0xff]
    %v298 = vld [vmem:[%s2 + $0x50] sm:$0xff]
    %v299 = vld [vmem:[%s2 + $0x58] sm:$0xff]
    %v300 = vld [vmem:[%s2 + $0x60] sm:$0xff]
    %v301 = vld [vmem:[%s2 + $0x68] sm:$0xff]
    %v302 = vld [vmem:[%s2 + $0x70] sm:$0xff]
    %v303 = vld [vmem:[%s2 + $0x78] sm:$0xff]
    %v304 = vld [vmem:[%s2 + $0x80] sm:$0xff]
    %v305 = vld [vmem:[%s2 + $0x88] sm:$0xff]
    %v306 = vld [vmem:[%s2 + $0x90] sm:$0xff]
    %v307 = vld [vmem:[%s2 + $0x98] sm:$0xff]
    %v308 = vld [vmem:[%s2 + $0xa0] sm:$0xff]
    %v309 = vld [vmem:[%s2 + $0xa8] sm:$0xff]
    %v310 = vld [vmem:[%s2 + $0xb0] sm:$0xff]
    %v311 = vld [vmem:[%s2 + $0xb8] sm:$0xff]
    %v312 = vld [vmem:[%s2 + $0xc0] sm:$0xff]
    %v313 = vld [vmem:[%s2 + $0xc8] sm:$0xff]
    %v314 = vld [vmem:[%s2 + $0xd0] sm:$0xff]
    %v315 = vld [vmem:[%s2 + $0xd8] sm:$0xff]
    %v316 = vld [vmem:[%s2 + $0xe0] sm:$0xff]
    %v317 = vld [vmem:[%s2 + $0xe8] sm:$0xff]
    %v318 = vld [vmem:[%s2 + $0xf0] sm:$0xff]
    %v319 = vld [vmem:[%s2 + $0xf8] sm:$0xff]
    %vm320 = vcmask 261120
    %v322 = vsel %vm320, %v280, 0
    %v325 = vsel %vm320, %v285, 0
    %v328 = vsel %vm320, %v288, 0
    %v331 = vsel %vm320, %v289, 0
    %v334 = vsel %vm320, %v290, 0
    %v337 = vsel %vm320, %v291, 0
    %v340 = vsel %vm320, %v292, 0
    %v343 = vsel %vm320, %v293, 0
    %v346 = vsel %vm320, %v294, 0
    %v349 = vsel %vm320, %v295, 0
    %v352 = vsel %vm320, %v296, 0
    %v355 = vsel %vm320, %v297, 0
    %v358 = vsel %vm320, %v298, 0
    %v361 = vsel %vm320, %v299, 0
    %v364 = vsel %vm320, %v300, 0
    %v367 = vsel %vm320, %v301, 0
    %v370 = vsel %vm320, %v302, 0
    %v373 = vsel %vm320, %v303, 0
    %v376 = vsel %vm320, %v304, 0
    %v379 = vsel %vm320, %v305, 0
    %v382 = vsel %vm320, %v306, 0
    %v385 = vsel %vm320, %v307, 0
    %v388 = vsel %vm320, %v308, 0
    %v391 = vsel %vm320, %v309, 0
    %v394 = vsel %vm320, %v310, 0
    %v397 = vsel %vm320, %v311, 0
    %v400 = vsel %vm320, %v312, 0
    %v403 = vsel %vm320, %v313, 0
    %v406 = vsel %vm320, %v314, 0
    %v409 = vsel %vm320, %v315, 0
    %v412 = vsel %vm320, %v316, 0
    %v415 = vsel %vm320, %v317, 0
    %v418 = vsel %vm320, %v318, 0
    %v421 = vsel %vm320, %v319, 0
    %423 = vmatprep.subr.mxu0 0.0
    %424 = vmatpush1.xpose.msra.mxu0 %v328
    %425 = vmatprep.subr.mxu0 0.0
    %426 = vmatpush1.xpose.msra.mxu0 %v331
    %427 = vmatprep.subr.mxu0 0.0
    %428 = vmatpush1.xpose.msra.mxu0 %v334
    %429 = vmatprep.subr.mxu0 0.0
    %430 = vmatpush1.xpose.msra.mxu0 %v337
    %431 = vmatprep.subr.mxu0 0.0
    %432 = vmatpush1.xpose.msra.mxu0 %v340
    %433 = vmatprep.subr.mxu0 0.0
    %434 = vmatpush1.xpose.msra.mxu0 %v343
    %435 = vmatprep.subr.mxu0 0.0
    %436 = vmatpush1.xpose.msra.mxu0 %v346
    %437 = vmatprep.subr.mxu0 0.0
    %438 = vmatpush1.xpose.msra.mxu0 %v349
    %439 = vmatprep.subr.mxu0 0.0
    %440 = vmatpush1.xpose.msra.mxu0 %v352
    %441 = vmatprep.subr.mxu0 0.0
    %442 = vmatpush1.xpose.msra.mxu0 %v355
    %443 = vmatprep.subr.mxu0 0.0
    %444 = vmatpush1.xpose.msra.mxu0 %v358
    %445 = vmatprep.subr.mxu0 0.0
    %446 = vmatpush1.xpose.msra.mxu0 %v361
    %447 = vmatprep.subr.mxu0 0.0
    %448 = vmatpush1.xpose.msra.mxu0 %v364
    %449 = vmatprep.subr.mxu0 0.0
    %450 = vmatpush1.xpose.msra.mxu0 %v367
    %451 = vmatprep.subr.mxu0 0.0
    %452 = vmatpush1.xpose.msra.mxu0 %v370
    %453 = vmatprep.subr.mxu0 0.0
    %454 = vmatpush1.xpose.msra.mxu0 %v373
    %455 = vmatprep.subr.mxu0 0.0
    %456 = vmatpush1.xpose.msra.mxu0 %v376
    %457 = vmatprep.subr.mxu0 0.0
    %458 = vmatpush1.xpose.msra.mxu0 %v379
    %459 = vmatprep.subr.mxu0 0.0
    %460 = vmatpush1.xpose.msra.mxu0 %v382
    %461 = vmatprep.subr.mxu0 0.0
    %462 = vmatpush1.xpose.msra.mxu0 %v385
    %463 = vmatprep.subr.mxu0 0.0
    %464 = vmatpush1.xpose.msra.mxu0 %v388
    %465 = vmatprep.subr.mxu0 0.0
    %466 = vmatpush1.xpose.msra.mxu0 %v391
    %467 = vmatprep.subr.mxu0 0.0
    %468 = vmatpush1.xpose.msra.mxu0 %v394
    %469 = vmatprep.subr.mxu0 0.0
    %470 = vmatpush1.xpose.msra.mxu0 %v397
    %471 = vmatprep.subr.mxu0 0.0
    %472 = vmatpush1.xpose.msra.mxu0 %v400
    %473 = vmatprep.subr.mxu0 0.0
    %474 = vmatpush1.xpose.msra.mxu0 %v403
    %475 = vmatprep.subr.mxu0 0.0
    %476 = vmatpush1.xpose.msra.mxu0 %v406
    %477 = vmatprep.subr.mxu0 0.0
    %478 = vmatpush1.xpose.msra.mxu0 %v409
    %479 = vmatprep.subr.mxu0 0.0
    %480 = vmatpush1.xpose.msra.mxu0 %v412
    %481 = vmatprep.subr.mxu0 0.0
    %482 = vmatpush1.xpose.msra.mxu0 %v415
    %483 = vmatprep.subr.mxu0 0.0
    %484 = vmatpush1.xpose.msra.mxu0 %v418
    %485 = vmatprep.subr.mxu0 0.0
    %486 = vmatpush1.xpose.msra.mxu0 %v421
    %487 = vmatprep.mubr.f32.mxu0 0.0
    %488 = vmatmul.mubr.f32.gmra.mrb[0].mxu0 %v322
    %v489 = vpop.f32.mrb[0].mxu0
    %v490 = vadd.f32 0.0, %v489
    %v491 = vpop.f32.mrb[0].mxu0
    %v492 = vadd.f32 0.0, %v491
    %493 = vmatprep.mubr.f32.mxu0 0.0
    %494 = vmatmul.mubr.f32.gmra.mrb[0].mxu0 %v325
    %v495 = vpop.f32.mrb[0].mxu0
    %v496 = vadd.f32 0.0, %v495
    %v497 = vpop.f32.mrb[0].mxu0
    %v498 = vadd.f32 0.0, %v497
    %499 = vdwg.mxu0
    %500 = vst [vmem:[#allocation2] sm:$0xff] %v490
    %501 = vst [vmem:[#allocation2 + $0x8] sm:$0xff] %v492
    %502 = vst [vmem:[#allocation2 + $0x10] sm:$0xff] %v496
    %503 = vst [vmem:[#allocation2 + $0x18] sm:$0xff] %v498
    // Predicated region
    $region14: #{dummy_gpt_forward.1} parent=1 // pred_check
      _
    $region15: #{dummy_gpt_forward.1} parent=1 // pred_check_branch
      %505 = sbr.rel (0) target = $region17
    $region16: #{dummy_gpt_forward.1} parent=1 // pred_region
      %s507 = ssub.s32 512, 512
      %508 = vsyncadd [#allocation3], %s507
      %s509 = sshll.u32 [#allocation2], 4
      %s510 = int_to_ptr.vmem [resolvable:$true] %s509
      %515 = dma.vmem_to_hbm [thread:$0]  %s510, 512, %s3, [#allocation3], 256, 256, 16
    $region17: #{dummy_gpt_forward.1} parent=1 // pred_fallthru
      _
    // Predicated region
    $region18: #{dummy_gpt_forward.1} parent=1 // pred_check
      _
    $region19: #{dummy_gpt_forward.1} parent=1 // pred_check_branch
      %517 = sbr.rel (0) target = $region21
    $region20: #{dummy_gpt_forward.1} parent=1 // pred_region
      %518 = dma.done [#allocation3], 512
    $region21: #{dummy_gpt_forward.1} parent=1 // pred_fallthru
      _
    %519 = vsyncpa [#allocation3], 1

</llo_original>
